<compile_context>
chip_gen: v5e
topology: v5e:2x2
jax: 0.10.0
libtpu: 0.0.40
codegen_flags: <defaults>
</compile_context>

<pallas_src>
import functools

import jax
import jax.numpy as jnp
import numpy as np
from jax.experimental import pallas as pl
from jax.experimental.pallas import tpu as pltpu


MATMUL_DTYPE = jnp.bfloat16   # MXU operand dtype; accumulation is always f32.
K_PAD = 128                   # lane-dense input width (90 taps + ones col + zeros)
ONES_COL = 90                 # index of the bias "ones column" in the input slab


def _ceil_to(x, m):
    return ((x + m - 1) // m) * m


def _pick_tile(n, tile_n):
    """Batch tile: multiple of 16 (bf16 sublane pack).  Keep >= 2 grid blocks
    when the batch is large enough (v7x megacore); single block otherwise."""
    if n >= 2 * tile_n:
        return tile_n
    if n > tile_n:
        return _ceil_to((n + 1) // 2, 16)
    return _ceil_to(max(n, 1), 16)


def _use_bf16_epilogue():
    """bf16 ReLU/cast epilogue on v6e/v7x (bf16 VPU); f32 on v5e (no bf16 VPU)."""
    try:
        kind = jax.devices()[0].device_kind.lower()
    except Exception:
        return False
    return ("v6" in kind) or ("v7" in kind) or ("7x" in kind)


# --------------------------------------------------------------------------- #
# Kernel: five lane-dense matmuls; biases folded in, epilogue = ReLU only.    #
# --------------------------------------------------------------------------- #
def _make_kernel(bf16_epilogue):
    def kernel(x_ref,                         # (tn, 128)  bf16  (ones col at 90)
               w1_ref,                        # (128, 512) bf16
               w2_ref,                        # (512, 384) bf16
               w3_ref,                        # (384, 128) bf16
               fw1_ref,                       # (128, 128) bf16
               fw2_ref,                       # (128, 3)   bf16
               out_ref):                      # (tn, 3)    f32
        f32 = jnp.float32

        def relu_cast(acc):
            # ReLU commutes with round-to-bf16.  On v6e/v7x cast first and ReLU
            # in bf16 (halves the VPU work on the big (tn,512)/(tn,384) tiles);
            # on v5e keep the ReLU in f32 (no bf16 VPU).
            if bf16_epilogue:
                return jnp.maximum(acc.astype(MATMUL_DTYPE), 0)
            return jnp.maximum(acc, 0.0).astype(MATMUL_DTYPE)

        x = x_ref[...]
        # conv1 (+BN1, +bias) + ReLU :  (tn,128) @ (128,512)
        a1 = relu_cast(jnp.dot(x, w1_ref[...], preferred_element_type=f32))
        # conv2 (+BN2, +bias) + ReLU :  (tn,512) @ (512,384)
        a2 = relu_cast(jnp.dot(a1, w2_ref[...], preferred_element_type=f32))
        # conv3 (+bias) + ReLU       :  (tn,384) @ (384,128)
        a3 = relu_cast(jnp.dot(a2, w3_ref[...], preferred_element_type=f32))
        # fc1 (+bias) + ReLU         :  (tn,128) @ (128,128)
        h = relu_cast(jnp.dot(a3, fw1_ref[...], preferred_element_type=f32))
        # fc2 (+bias)                :  (tn,128) @ (128,3)
        out_ref[...] = jnp.dot(h, fw2_ref[...], preferred_element_type=f32)

    return kernel


# --------------------------------------------------------------------------- #
# Host-side precompute: im2col dense matrices, BN folded, biases as ones-row. #
# --------------------------------------------------------------------------- #
def _conv_to_dense(w_hwio, in_h, in_w, cin, pad, out_h, out_w):
    """Build the (in_h*in_w*cin, out_h*out_w*cout) matrix of a 3x3 conv.
    Zero-padding taps become zero rows.  Row index = (ii*in_w + jj)*cin + c,
    column index = (oi*out_w + oj)*cout + co (row-major HWC flatten order)."""
    w = np.asarray(w_hwio, np.float32)
    kh, kw, _, cout = w.shape
    big = np.zeros((in_h * in_w * cin, out_h * out_w * cout), np.float32)
    for oi in range(out_h):
        for oj in range(out_w):
            col0 = (oi * out_w + oj) * cout
            for di in range(kh):
                ii = oi + di - pad
                if not (0 <= ii < in_h):
                    continue
                for dj in range(kw):
                    jj = oj + dj - pad
                    if not (0 <= jj < in_w):
                        continue
                    row0 = (ii * in_w + jj) * cin
                    big[row0:row0 + cin, col0:col0 + cout] = w[di, dj]
    return big


def _augment(dense, shift, k_pad, n_pad_cols):
    """Zero-pad a (K, M) layer matrix to (k_pad, n_pad_cols), add the bias row
    at row K (multiplied by the incoming ones column) and, when there is room,
    a pass-through 1.0 at column M so the ones column survives into the next
    layer (1.0 is ReLU- and bf16-exact)."""
    k, m = dense.shape
    out = np.zeros((k_pad, n_pad_cols), np.float32)
    out[:k, :m] = dense
    out[k, :m] = np.asarray(shift, np.float32)
    if n_pad_cols > m:
        out[k, m] = 1.0
    return out


def prepare_fused_params(p):
    """One-time wrapper-side precompute (layout plumbing, not kernel compute)."""
    # Fold eval-mode BN scale into conv weights, BN shift + conv bias into the
    # per-column shift that becomes the ones-row.
    w1f = np.asarray(p["w1"]) * np.asarray(p["s1"]).reshape(1, 1, 1, -1)
    c1 = (np.asarray(p["b1"]) * np.asarray(p["s1"]) + np.asarray(p["t1"])).reshape(-1)
    w2f = np.asarray(p["w2"]) * np.asarray(p["s2"]).reshape(1, 1, 1, -1)
    c2 = (np.asarray(p["b2"]) * np.asarray(p["s2"]) + np.asarray(p["t2"])).reshape(-1)

    W1 = _conv_to_dense(w1f, 3, 3, 10, pad=2, out_h=5, out_w=5)            # (90, 400)
    W2 = _conv_to_dense(w2f, 5, 5, 16, pad=0, out_h=3, out_w=3)            # (400, 288)
    W3 = _conv_to_dense(p["w3"], 3, 3, 32, pad=0, out_h=1, out_w=1)        # (288, 32)

    mm = MATMUL_DTYPE
    return {
        # (K_in padded, N_out padded); bias row at K_in, pass-through at N_out.
        "W1": jnp.asarray(_augment(W1, np.tile(c1, 25), 128, 512), mm),
        "W2": jnp.asarray(_augment(W2, np.tile(c2, 9), 512, 384), mm),
        "W3": jnp.asarray(_augment(W3, np.asarray(p["b3"]).reshape(-1), 384, 128), mm),
        "FW1": jnp.asarray(_augment(np.asarray(p["fw1"]),
                                    np.asarray(p["fb1"]).reshape(-1), 128, 128), mm),
        "FW2": jnp.asarray(_augment(np.asarray(p["fw2"]),
                                    np.asarray(p["fb2"]).reshape(-1), 128, 3), mm),
    }


# --------------------------------------------------------------------------- #
# Wrapper                                                                      #
# --------------------------------------------------------------------------- #
def simple_model_forward(x, fp, *, tile_n=1024):
    """x: (N, H, W, 10) float32 (the pre-permute layout the PyTorch forward expects)."""
    n = x.shape[0]

    # Wrapper layout plumbing: crop == x.permute(0,3,1,2)[:, :, 3:6, 3:6],
    # flatten per sample in (h, w, c) order, append the bias ones-column and
    # zero-pad K to a lane-dense 128, cast to bf16.  Under jit this fuses into
    # one XLA pass; for very large N this slab should be produced upstream so
    # the kernel input DMA is the only HBM traffic.
    x_crop = x[:, 3:6, 3:6, :].reshape(n, 90)
    x_aug = jnp.concatenate(
        [x_crop,
         jnp.ones((n, 1), x_crop.dtype),                       # ones col (90)
         jnp.zeros((n, K_PAD - ONES_COL - 1), x_crop.dtype)],  # zero pad to 128
        axis=1).astype(MATMUL_DTYPE)

    tn = _pick_tile(n, tile_n)
    n_pad = _ceil_to(n, tn)
    if n_pad != n:
        # Padded rows are all-zero (including the ones column) -> output rows 0.
        x_aug = jnp.pad(x_aug, ((0, n_pad - n), (0, 0)))

    weights = (fp["W1"], fp["W2"], fp["W3"], fp["FW1"], fp["FW2"])

    def const_spec(a):
        return pl.BlockSpec(a.shape, lambda i: (0, 0))

    out = pl.pallas_call(
        _make_kernel(_use_bf16_epilogue()),
        out_shape=jax.ShapeDtypeStruct((n_pad, 3), jnp.float32),
        grid=(n_pad // tn,),
        in_specs=[pl.BlockSpec((tn, K_PAD), lambda i: (i, 0))]
                 + [const_spec(w) for w in weights],
        out_specs=pl.BlockSpec((tn, 3), lambda i: (i, 0)),
        compiler_params=pltpu.CompilerParams(
            dimension_semantics=("parallel",)),
    )(x_aug, *weights)
    return out[:n]


# --------------------------------------------------------------------------- #
# Parameters + pure-JAX reference (mirrors the PyTorch forward, eval-mode BN)  #
# --------------------------------------------------------------------------- #
def make_params():
    key = jax.random.PRNGKey(0)
    ks = jax.random.split(key, 20)
    f32 = jnp.float32
    eps = 1e-5

    def bn_fold(kg, kb, km, kv, c):
        gamma = 1.0 + 0.1 * jax.random.normal(kg, (c,), f32)
        beta = 0.1 * jax.random.normal(kb, (c,), f32)
        mean = 0.1 * jax.random.normal(km, (c,), f32)
        var = 0.5 + jax.random.uniform(kv, (c,), f32)          # strictly positive
        scale = gamma / jnp.sqrt(var + eps)
        shift = beta - mean * scale
        return scale.reshape(1, c), shift.reshape(1, c)

    s1, t1 = bn_fold(ks[2], ks[3], ks[4], ks[5], 16)
    s2, t2 = bn_fold(ks[8], ks[9], ks[10], ks[11], 32)

    return {
        # conv weights in HWIO layout: (kh, kw, Cin, Cout)
        "w1": 0.1 * jax.random.normal(ks[0], (3, 3, 10, 16), f32),
        "b1": (0.1 * jax.random.normal(ks[1], (16,), f32)).reshape(1, 16),
        "s1": s1, "t1": t1,
        "w2": 0.1 * jax.random.normal(ks[6], (3, 3, 16, 32), f32),
        "b2": (0.1 * jax.random.normal(ks[7], (32,), f32)).reshape(1, 32),
        "s2": s2, "t2": t2,
        "w3": 0.1 * jax.random.normal(ks[12], (3, 3, 32, 32), f32),
        "b3": (0.1 * jax.random.normal(ks[13], (32,), f32)).reshape(1, 32),
        # linear weights as (in, out)
        "fw1": 0.1 * jax.random.normal(ks[14], (32, 16), f32),
        "fb1": (0.1 * jax.random.normal(ks[15], (16,), f32)).reshape(1, 16),
        "fw2": 0.1 * jax.random.normal(ks[16], (16, 3), f32),
        "fb2": (0.1 * jax.random.normal(ks[17], (3,), f32)).reshape(1, 3),
    }


def reference_forward(x, p):
    hp = jax.lax.Precision.HIGHEST

    def conv(inp, w, pad):
        return jax.lax.conv_general_dilated(
            inp, w, (1, 1), [(pad, pad), (pad, pad)],
            dimension_numbers=("NHWC", "HWIO", "NHWC"), precision=hp)

    def bc(v):
        return v.reshape(1, 1, 1, -1)

    xc = x[:, 3:6, 3:6, :]
    y = conv(xc, p["w1"], 2) + bc(p["b1"])
    y = jnp.maximum(y * bc(p["s1"]) + bc(p["t1"]), 0.0)
    y = conv(y, p["w2"], 0) + bc(p["b2"])
    y = jnp.maximum(y * bc(p["s2"]) + bc(p["t2"]), 0.0)
    y = conv(y, p["w3"], 0) + bc(p["b3"])
    y = jnp.maximum(y, 0.0)                            # (N, 1, 1, 32)
    z = y.reshape(-1, 32)
    h = jnp.maximum(jnp.dot(z, p["fw1"], precision=hp) + p["fb1"], 0.0)
    return jnp.dot(h, p["fw2"], precision=hp) + p["fb2"]


if __name__ == "__main__":
    key = jax.random.PRNGKey(0)
    params = make_params()
    fused = prepare_fused_params(params)

    # Small deterministic test batch in the module's expected (N, H, W, 10) layout.
    x = jax.random.normal(jax.random.fold_in(key, 123), (2, 16, 16, 10), jnp.float32)

    fwd = jax.jit(lambda xx: simple_model_forward(xx, fused))
    out = jax.block_until_ready(fwd(x))
    assert out.shape == (2, 3) and out.dtype == jnp.float32
    ref = reference_forward(x, params)
    # bf16 MXU operands (f32 accumulation) -> slightly looser tolerance.
    assert jnp.allclose(out, ref, rtol=5e-2, atol=5e-2), (out, ref)

    # Exercise the multi-block ("parallel") grid path with batch padding.
    x2 = jax.random.normal(jax.random.fold_in(key, 7), (40, 16, 16, 10), jnp.float32)
    out2 = jax.block_until_ready(simple_model_forward(x2, fused, tile_n=16))
    ref2 = reference_forward(x2, params)
    assert out2.shape == (40, 3)
    assert jnp.allclose(out2, ref2, rtol=5e-2, atol=5e-2)

    print("KERNEL_OK")
</pallas_src>

<mosaic_0001>
module attributes {stable_mosaic.version = 11 : i64} {
  func.func @kernel(%arg0: i32, %arg1: memref<16x128xbf16, #tpu.memory_space<vmem>>, %arg2: memref<128x512xbf16, #tpu.memory_space<vmem>>, %arg3: memref<512x384xbf16, #tpu.memory_space<vmem>>, %arg4: memref<384x128xbf16, #tpu.memory_space<vmem>>, %arg5: memref<128x128xbf16, #tpu.memory_space<vmem>>, %arg6: memref<128x3xbf16, #tpu.memory_space<vmem>>, %arg7: memref<16x3xf32, #tpu.memory_space<vmem>>) attributes {dimension_semantics = [#tpu.dimension_semantics<parallel>], iteration_bounds = array<i64: 1>, scalar_prefetch = 0 : i64, scratch_operands = 0 : i64, tpu.core_type = #tpu.core_type<tc>, window_params = [{transform_indices = @transform_0, window_bounds = array<i64: 16, 128>}, {pipeline_mode = #tpu.pipeline_mode<synchronous>, transform_indices = @transform_1, window_bounds = array<i64: 128, 512>}, {pipeline_mode = #tpu.pipeline_mode<synchronous>, transform_indices = @transform_2, window_bounds = array<i64: 512, 384>}, {pipeline_mode = #tpu.pipeline_mode<synchronous>, transform_indices = @transform_3, window_bounds = array<i64: 384, 128>}, {pipeline_mode = #tpu.pipeline_mode<synchronous>, transform_indices = @transform_4, window_bounds = array<i64: 128, 128>}, {pipeline_mode = #tpu.pipeline_mode<synchronous>, transform_indices = @transform_5, window_bounds = array<i64: 128, 3>}, {transform_indices = @transform_6, window_bounds = array<i64: 16, 3>}]} {
    %c0 = arith.constant 0 : index
    %c0_0 = arith.constant 0 : index
    %0 = vector.load %arg1[%c0, %c0_0] : memref<16x128xbf16, #tpu.memory_space<vmem>>, vector<16x128xbf16>
    %c0_1 = arith.constant 0 : index
    %c0_2 = arith.constant 0 : index
    %1 = vector.load %arg2[%c0_1, %c0_2] : memref<128x512xbf16, #tpu.memory_space<vmem>>, vector<128x512xbf16>
    %cst = arith.constant dense<0.000000e+00> : vector<16x512xf32>
    %2 = tpu.matmul %0, %1, %cst {dimension_numbers = #tpu.dot_dimension_numbers<[1], [0], [0], [1], [0, 0, 1, 1], [], []>} : vector<16x128xbf16>, vector<128x512xbf16>, vector<16x512xf32> -> vector<16x512xf32>
    %cst_3 = arith.constant 0.000000e+00 : f32
    %3 = vector.broadcast %cst_3 : f32 to vector<16x512xf32>
    %4 = arith.maximumf %2, %3 : vector<16x512xf32>
    %5 = arith.truncf %4 : vector<16x512xf32> to vector<16x512xbf16>
    %c0_4 = arith.constant 0 : index
    %c0_5 = arith.constant 0 : index
    %6 = vector.load %arg3[%c0_4, %c0_5] : memref<512x384xbf16, #tpu.memory_space<vmem>>, vector<512x384xbf16>
    %cst_6 = arith.constant dense<0.000000e+00> : vector<16x384xf32>
    %7 = tpu.matmul %5, %6, %cst_6 {dimension_numbers = #tpu.dot_dimension_numbers<[1], [0], [0], [1], [0, 0, 1, 1], [], []>} : vector<16x512xbf16>, vector<512x384xbf16>, vector<16x384xf32> -> vector<16x384xf32>
    %cst_7 = arith.constant 0.000000e+00 : f32
    %8 = vector.broadcast %cst_7 : f32 to vector<16x384xf32>
    %9 = arith.maximumf %7, %8 : vector<16x384xf32>
    %10 = arith.truncf %9 : vector<16x384xf32> to vector<16x384xbf16>
    %c0_8 = arith.constant 0 : index
    %c0_9 = arith.constant 0 : index
    %11 = vector.load %arg4[%c0_8, %c0_9] : memref<384x128xbf16, #tpu.memory_space<vmem>>, vector<384x128xbf16>
    %cst_10 = arith.constant dense<0.000000e+00> : vector<16x128xf32>
    %12 = tpu.matmul %10, %11, %cst_10 {dimension_numbers = #tpu.dot_dimension_numbers<[1], [0], [0], [1], [0, 0, 1, 1], [], []>} : vector<16x384xbf16>, vector<384x128xbf16>, vector<16x128xf32> -> vector<16x128xf32>
    %cst_11 = arith.constant 0.000000e+00 : f32
    %13 = vector.broadcast %cst_11 : f32 to vector<16x128xf32>
    %14 = arith.maximumf %12, %13 : vector<16x128xf32>
    %15 = arith.truncf %14 : vector<16x128xf32> to vector<16x128xbf16>
    %c0_12 = arith.constant 0 : index
    %c0_13 = arith.constant 0 : index
    %16 = vector.load %arg5[%c0_12, %c0_13] : memref<128x128xbf16, #tpu.memory_space<vmem>>, vector<128x128xbf16>
    %cst_14 = arith.constant dense<0.000000e+00> : vector<16x128xf32>
    %17 = tpu.matmul %15, %16, %cst_14 {dimension_numbers = #tpu.dot_dimension_numbers<[1], [0], [0], [1], [0, 0, 1, 1], [], []>} : vector<16x128xbf16>, vector<128x128xbf16>, vector<16x128xf32> -> vector<16x128xf32>
    %cst_15 = arith.constant 0.000000e+00 : f32
    %18 = vector.broadcast %cst_15 : f32 to vector<16x128xf32>
    %19 = arith.maximumf %17, %18 : vector<16x128xf32>
    %20 = arith.truncf %19 : vector<16x128xf32> to vector<16x128xbf16>
    %c0_16 = arith.constant 0 : index
    %c0_17 = arith.constant 0 : index
    %21 = vector.load %arg6[%c0_16, %c0_17] : memref<128x3xbf16, #tpu.memory_space<vmem>>, vector<128x3xbf16>
    %cst_18 = arith.constant dense<0.000000e+00> : vector<16x3xf32>
    %22 = tpu.matmul %20, %21, %cst_18 {dimension_numbers = #tpu.dot_dimension_numbers<[1], [0], [0], [1], [0, 0, 1, 1], [], []>} : vector<16x128xbf16>, vector<128x3xbf16>, vector<16x3xf32> -> vector<16x3xf32>
    %c0_19 = arith.constant 0 : index
    %c0_20 = arith.constant 0 : index
    %23 = vector.load %arg7[%c0_19, %c0_20] : memref<16x3xf32, #tpu.memory_space<vmem>>, vector<16x3xf32>
    tpu.vector_store %arg7[%c0_19, %c0_20], %22 {strides = array<i32>} : memref<16x3xf32, #tpu.memory_space<vmem>>, vector<16x3xf32>,
    return
  }
  func.func @transform_0(%arg0: i32) -> (i32, i32) {
    %c0_i32 = arith.constant 0 : i32
    %c0_i32_0 = arith.constant 0 : i32
    return %arg0, %c0_i32 : i32, i32
  }
  func.func @transform_1(%arg0: i32) -> (i32, i32) {
    %c0_i32 = arith.constant 0 : i32
    %c0_i32_0 = arith.constant 0 : i32
    %c0_i32_1 = arith.constant 0 : i32
    return %c0_i32, %c0_i32_0 : i32, i32
  }
  func.func @transform_2(%arg0: i32) -> (i32, i32) {
    %c0_i32 = arith.constant 0 : i32
    %c0_i32_0 = arith.constant 0 : i32
    %c0_i32_1 = arith.constant 0 : i32
    return %c0_i32, %c0_i32_0 : i32, i32
  }
  func.func @transform_3(%arg0: i32) -> (i32, i32) {
    %c0_i32 = arith.constant 0 : i32
    %c0_i32_0 = arith.constant 0 : i32
    %c0_i32_1 = arith.constant 0 : i32
    return %c0_i32, %c0_i32_0 : i32, i32
  }
  func.func @transform_4(%arg0: i32) -> (i32, i32) {
    %c0_i32 = arith.constant 0 : i32
    %c0_i32_0 = arith.constant 0 : i32
    %c0_i32_1 = arith.constant 0 : i32
    return %c0_i32, %c0_i32_0 : i32, i32
  }
  func.func @transform_5(%arg0: i32) -> (i32, i32) {
    %c0_i32 = arith.constant 0 : i32
    %c0_i32_0 = arith.constant 0 : i32
    %c0_i32_1 = arith.constant 0 : i32
    return %c0_i32, %c0_i32_0 : i32, i32
  }
  func.func @transform_6(%arg0: i32) -> (i32, i32) {
    %c0_i32 = arith.constant 0 : i32
    %c0_i32_0 = arith.constant 0 : i32
    return %arg0, %c0_i32 : i32, i32
  }
}

</mosaic_0001>

<llo_original>
// kernel: _lambda_.1
$region0: #{_lambda_.1}
  #allocation0 [shape = 'u32[]', space=smem, size = 0x4, offset = 0x4, fixed_abs, tag = 'smem constant byte address 0x4 - core index']
  #allocation1 [shape = 'u32[72,128]{1,0:T(1,128)}', space=vmem, size = 0x9000, scoped, tag = 'internal scratch']
  %s0 = inlined_call_operand.vmem [shape: bf16[16,128], index: 0, kind: input, shape index: {}]
  %s1 = inlined_call_operand.hbm [shape: bf16[128,512], index: 1, kind: input, shape index: {}]
  %s2 = inlined_call_operand.hbm [shape: bf16[512,384], index: 2, kind: input, shape index: {}]
  %s3 = inlined_call_operand.hbm [shape: bf16[384,128], index: 3, kind: input, shape index: {}]
  %s4 = inlined_call_operand.vmem [shape: bf16[128,128], index: 4, kind: input, shape index: {}]
  %s5 = inlined_call_operand.vmem [shape: bf16[128,3], index: 5, kind: input, shape index: {}]
  %s6 = inlined_call_operand.vmem [shape: f32[16,3], index: 6, kind: output, shape index: {}]
  %s7 = sld [smem:[#allocation0]]
  $region46: #{_lambda_.1} parent=0
    _
  %s9 = ssub.s32 1, %s7
  %s10 = scalar_select 0, %s9, %s7
  $region1: #{_lambda_.1} parent=0
    #allocation2 [shape = 'u8[131072]{0}', space=vmem, size = 0x20000, scoped, tag = 'input window, operand 1, single buffered']
    #allocation3 [shape = 's32[1]{0}', space=sflag, size = 0x4, scoped, tag = 'scoped memory for _lambda_.1']
    #allocation4 [shape = 'u8[393216]{0}', space=vmem, size = 0x60000, scoped, tag = 'input window, operand 2, single buffered']
    #allocation5 [shape = 's32[1]{0}', space=sflag, size = 0x4, scoped, tag = 'scoped memory for _lambda_.1']
    #allocation6 [shape = 'u8[98304]{0}', space=vmem, size = 0x18000, scoped, tag = 'input window, operand 3, single buffered']
    %11 = vsyncpa [#allocation3], 0
    %12 = vsyncpa [#allocation5], 0
    // Predicated region
    $region2: #{_lambda_.1} parent=1 // pred_check
      _
    $region3: #{_lambda_.1} parent=1 // pred_check_branch
      %14 = sbr.rel (0) target = $region5
    $region4: #{_lambda_.1} parent=1 // pred_region
      _
    $region5: #{_lambda_.1} parent=1 // pred_fallthru
      _
    // Predicated region
    $region6: #{_lambda_.1} parent=1 // pred_check
      _
    $region7: #{_lambda_.1} parent=1 // pred_check_branch
      %16 = sbr.rel (0) target = $region9
    $region8: #{_lambda_.1} parent=1 // pred_region
      %18 = vsyncadd [#allocation3], 0
      %s19 = sshll.u32 %s1, 4
      %s20 = int_to_ptr.hbm [resolvable:$true] %s19
      %s21 = sshll.u32 [#allocation2], 4
      %s22 = int_to_ptr.vmem [resolvable:$true] %s21
      %27 = dma.hbm_to_vmem [thread:$0]  %s20, 4096, %s22, [#allocation3], 256, 256, 16
    $region9: #{_lambda_.1} parent=1 // pred_fallthru
      _
    // Predicated region
    $region10: #{_lambda_.1} parent=1 // pred_check
      _
    $region11: #{_lambda_.1} parent=1 // pred_check_branch
      %29 = sbr.rel (0) target = $region13
    $region12: #{_lambda_.1} parent=1 // pred_region
      %31 = vsyncadd [#allocation5], 0
      %s32 = sshll.u32 %s2, 4
      %s33 = int_to_ptr.hbm [resolvable:$true] %s32
      %s34 = sshll.u32 [#allocation4], 4
      %s35 = int_to_ptr.vmem [resolvable:$true] %s34
      %40 = dma.hbm_to_vmem [thread:$0]  %s33, 12288, %s35, [#allocation5], 192, 192, 12
    $region13: #{_lambda_.1} parent=1 // pred_fallthru
      _
    // Predicated region
    $region14: #{_lambda_.1} parent=1 // pred_check
      _
    $region15: #{_lambda_.1} parent=1 // pred_check_branch
      %42 = sbr.rel (0) target = $region17
    $region16: #{_lambda_.1} parent=1 // pred_region
      %44 = vsyncadd [#allocation5], 0
      %s45 = sshll.u32 %s3, 4
      %s46 = int_to_ptr.hbm [resolvable:$true] %s45
      %s47 = sshll.u32 [#allocation6], 4
      %s48 = int_to_ptr.vmem [resolvable:$true] %s47
      %53 = dma.hbm_to_vmem [thread:$0]  %s46, 3072, %s48, [#allocation5], 64, 64, 4
    $region17: #{_lambda_.1} parent=1 // pred_fallthru
      _
    // Predicated region
    $region18: #{_lambda_.1} parent=1 // pred_check
      _
    $region19: #{_lambda_.1} parent=1 // pred_check_branch
      %55 = sbr.rel (0) target = $region21
    $region20: #{_lambda_.1} parent=1 // pred_region
      _
    $region21: #{_lambda_.1} parent=1 // pred_fallthru
      _
    // Predicated region
    $region22: #{_lambda_.1} parent=1 // pred_check
      _
    $region23: #{_lambda_.1} parent=1 // pred_check_branch
      %57 = sbr.rel (0) target = $region25
    $region24: #{_lambda_.1} parent=1 // pred_region
      _
    $region25: #{_lambda_.1} parent=1 // pred_fallthru
      _
    // Predicated region
    $region26: #{_lambda_.1} parent=1 // pred_check
      _
    $region27: #{_lambda_.1} parent=1 // pred_check_branch
      %59 = sbr.rel (0) target = $region29
    $region28: #{_lambda_.1} parent=1 // pred_region
      %61 = dma.done [#allocation3], 4096
    $region29: #{_lambda_.1} parent=1 // pred_fallthru
      _
    // Predicated region
    $region30: #{_lambda_.1} parent=1 // pred_check
      _
    $region31: #{_lambda_.1} parent=1 // pred_check_branch
      %63 = sbr.rel (0) target = $region33
    $region32: #{_lambda_.1} parent=1 // pred_region
      %65 = dma.done [#allocation5], 12288
    $region33: #{_lambda_.1} parent=1 // pred_fallthru
      _
    // Predicated region
    $region34: #{_lambda_.1} parent=1 // pred_check
      _
    $region35: #{_lambda_.1} parent=1 // pred_check_branch
      %67 = sbr.rel (0) target = $region37
    $region36: #{_lambda_.1} parent=1 // pred_region
      %69 = dma.done [#allocation5], 3072
    $region37: #{_lambda_.1} parent=1 // pred_fallthru
      _
    %v70 = vld [vmem:[%s0] sm:$0xf]
    %v71 = vld [vmem:[%s0 + $0x4] sm:$0xf]
    %v72 = vld [vmem:[#allocation2] sm:$0xff]
    %v73 = vld [vmem:[#allocation2 + $0x8] sm:$0xff]
    %v74 = vld [vmem:[#allocation2 + $0x10] sm:$0xff]
    %v75 = vld [vmem:[#allocation2 + $0x18] sm:$0xff]
    %v76 = vld [vmem:[#allocation2 + $0x20] sm:$0xff]
    %v77 = vld [vmem:[#allocation2 + $0x28] sm:$0xff]
    %v78 = vld [vmem:[#allocation2 + $0x30] sm:$0xff]
    %v79 = vld [vmem:[#allocation2 + $0x38] sm:$0xff]
    %v80 = vld [vmem:[#allocation2 + $0x40] sm:$0xff]
    %v81 = vld [vmem:[#allocation2 + $0x48] sm:$0xff]
    %v82 = vld [vmem:[#allocation2 + $0x50] sm:$0xff]
    %v83 = vld [vmem:[#allocation2 + $0x58] sm:$0xff]
    %v84 = vld [vmem:[#allocation2 + $0x60] sm:$0xff]
    %v85 = vld [vmem:[#allocation2 + $0x68] sm:$0xff]
    %v86 = vld [vmem:[#allocation2 + $0x70] sm:$0xff]
    %v87 = vld [vmem:[#allocation2 + $0x78] sm:$0xff]
    %v88 = vld [vmem:[#allocation2 + $0x80] sm:$0xff]
    %v89 = vld [vmem:[#allocation2 + $0x88] sm:$0xff]
    %v90 = vld [vmem:[#allocation2 + $0x90] sm:$0xff]
    %v91 = vld [vmem:[#allocation2 + $0x98] sm:$0xff]
    %v92 = vld [vmem:[#allocation2 + $0xa0] sm:$0xff]
    %v93 = vld [vmem:[#allocation2 + $0xa8] sm:$0xff]
    %v94 = vld [vmem:[#allocation2 + $0xb0] sm:$0xff]
    %v95 = vld [vmem:[#allocation2 + $0xb8] sm:$0xff]
    %v96 = vld [vmem:[#allocation2 + $0xc0] sm:$0xff]
    %v97 = vld [vmem:[#allocation2 + $0xc8] sm:$0xff]
    %v98 = vld [vmem:[#allocation2 + $0xd0] sm:$0xff]
    %v99 = vld [vmem:[#allocation2 + $0xd8] sm:$0xff]
    %v100 = vld [vmem:[#allocation2 + $0xe0] sm:$0xff]
    %v101 = vld [vmem:[#allocation2 + $0xe8] sm:$0xff]
    %v102 = vld [vmem:[#allocation2 + $0xf0] sm:$0xff]
    %v103 = vld [vmem:[#allocation2 + $0xf8] sm:$0xff]
    %v106 = vunpack.c.l.b16 %v70
    %v107 = vunpack.c.l.b16 %v71
    %v108 = vpack.c.b16 %v107, %v106
    %v142 = vunpack.c.l.b16 %v72
    %v143 = vunpack.c.h.b16 %v72
    %v144 = vunpack.c.l.b16 %v73
    %v145 = vunpack.c.h.b16 %v73
    %v146 = vunpack.c.l.b16 %v74
    %v147 = vunpack.c.h.b16 %v74
    %v148 = vunpack.c.l.b16 %v75
    %v149 = vunpack.c.h.b16 %v75
    %v150 = vunpack.c.l.b16 %v76
    %v151 = vunpack.c.h.b16 %v76
    %v152 = vunpack.c.l.b16 %v77
    %v153 = vunpack.c.h.b16 %v77
    %v154 = vunpack.c.l.b16 %v78
    %v155 = vunpack.c.h.b16 %v78
    %v156 = vunpack.c.l.b16 %v79
    %v157 = vunpack.c.h.b16 %v79
    %v158 = vunpack.c.l.b16 %v80
    %v159 = vunpack.c.h.b16 %v80
    %v160 = vunpack.c.l.b16 %v81
    %v161 = vunpack.c.h.b16 %v81
    %v162 = vunpack.c.l.b16 %v82
    %v163 = vunpack.c.h.b16 %v82
    %v164 = vunpack.c.l.b16 %v83
    %v165 = vunpack.c.h.b16 %v83
    %v166 = vunpack.c.l.b16 %v84
    %v167 = vunpack.c.h.b16 %v84
    %v168 = vunpack.c.l.b16 %v85
    %v169 = vunpack.c.h.b16 %v85
    %v170 = vunpack.c.l.b16 %v86
    %v171 = vunpack.c.h.b16 %v86
    %v172 = vunpack.c.l.b16 %v87
    %v173 = vunpack.c.h.b16 %v87
    %v174 = vunpack.c.l.b16 %v88
    %v175 = vunpack.c.h.b16 %v88
    %v176 = vunpack.c.l.b16 %v89
    %v177 = vunpack.c.h.b16 %v89
    %v178 = vunpack.c.l.b16 %v90
    %v179 = vunpack.c.h.b16 %v90
    %v180 = vunpack.c.l.b16 %v91
    %v181 = vunpack.c.h.b16 %v91
    %v182 = vunpack.c.l.b16 %v92
    %v183 = vunpack.c.h.b16 %v92
    %v184 = vunpack.c.l.b16 %v93
    %v185 = vunpack.c.h.b16 %v93
    %v186 = vunpack.c.l.b16 %v94
    %v187 = vunpack.c.h.b16 %v94
    %v188 = vunpack.c.l.b16 %v95
    %v189 = vunpack.c.h.b16 %v95
    %v190 = vunpack.c.l.b16 %v96
    %v191 = vunpack.c.h.b16 %v96
    %v192 = vunpack.c.l.b16 %v97
    %v193 = vunpack.c.h.b16 %v97
    %v194 = vunpack.c.l.b16 %v98
    %v195 = vunpack.c.h.b16 %v98
    %v196 = vunpack.c.l.b16 %v99
    %v197 = vunpack.c.h.b16 %v99
    %v198 = vunpack.c.l.b16 %v100
    %v199 = vunpack.c.h.b16 %v100
    %v200 = vunpack.c.l.b16 %v101
    %v201 = vunpack.c.h.b16 %v101
    %v202 = vunpack.c.l.b16 %v102
    %v203 = vunpack.c.h.b16 %v102
    %v204 = vunpack.c.l.b16 %v103
    %v205 = vunpack.c.h.b16 %v103
    %v206 = vpack.c.b16 %v146, %v142
    %v207 = vpack.c.b16 %v147, %v143
    %v208 = vpack.c.b16 %v148, %v144
    %v209 = vpack.c.b16 %v149, %v145
    %v210 = vpack.c.b16 %v154, %v150
    %v211 = vpack.c.b16 %v155, %v151
    %v212 = vpack.c.b16 %v156, %v152
    %v213 = vpack.c.b16 %v157, %v153
    %v214 = vpack.c.b16 %v162, %v158
    %v215 = vpack.c.b16 %v163, %v159
    %v216 = vpack.c.b16 %v164, %v160
    %v217 = vpack.c.b16 %v165, %v161
    %v218 = vpack.c.b16 %v170, %v166
    %v219 = vpack.c.b16 %v171, %v167
    %v220 = vpack.c.b16 %v172, %v168
    %v221 = vpack.c.b16 %v173, %v169
    %v222 = vpack.c.b16 %v178, %v174
    %v223 = vpack.c.b16 %v179, %v175
    %v224 = vpack.c.b16 %v180, %v176
    %v225 = vpack.c.b16 %v181, %v177
    %v226 = vpack.c.b16 %v186, %v182
    %v227 = vpack.c.b16 %v187, %v183
    %v228 = vpack.c.b16 %v188, %v184
    %v229 = vpack.c.b16 %v189, %v185
    %v230 = vpack.c.b16 %v194, %v190
    %v231 = vpack.c.b16 %v195, %v191
    %v232 = vpack.c.b16 %v196, %v192
    %v233 = vpack.c.b16 %v197, %v193
    %v234 = vpack.c.b16 %v202, %v198
    %v235 = vpack.c.b16 %v203, %v199
    %v236 = vpack.c.b16 %v204, %v200
    %v237 = vpack.c.b16 %v205, %v201
    %270 = vmatpush.bf16.msra.mxu0 %v234
    %271 = vmatpush.bf16.msra.mxu0 %v230
    %272 = vmatpush.bf16.msra.mxu0 %v226
    %273 = vmatpush.bf16.msra.mxu0 %v222
    %274 = vmatpush.bf16.msra.mxu0 %v218
    %275 = vmatpush.bf16.msra.mxu0 %v214
    %276 = vmatpush.bf16.msra.mxu0 %v210
    %277 = vmatpush.bf16.msra.mxu0 %v206
    %278 = vmatmul.bf16.gmra.mxu0 %v108
    %v279 = vpop.f32.mrf.mxu0
    %v280 = vadd.f32 0.0, %v279
    %v281 = vpop.f32.mrf.mxu0
    %v282 = vadd.f32 0.0, %v281
    %283 = vdwg.mxu0
    %284 = vmatpush.bf16.msra.mxu0 %v235
    %285 = vmatpush.bf16.msra.mxu0 %v231
    %286 = vmatpush.bf16.msra.mxu0 %v227
    %287 = vmatpush.bf16.msra.mxu0 %v223
    %288 = vmatpush.bf16.msra.mxu0 %v219
    %289 = vmatpush.bf16.msra.mxu0 %v215
    %290 = vmatpush.bf16.msra.mxu0 %v211
    %291 = vmatpush.bf16.msra.mxu0 %v207
    %292 = vmatmul.bf16.gmra.mxu0 %v108
    %v293 = vpop.f32.mrf.mxu0
    %v294 = vadd.f32 0.0, %v293
    %v295 = vpop.f32.mrf.mxu0
    %v296 = vadd.f32 0.0, %v295
    %297 = vdwg.mxu0
    %298 = vmatpush.bf16.msra.mxu0 %v236
    %299 = vmatpush.bf16.msra.mxu0 %v232
    %300 = vmatpush.bf16.msra.mxu0 %v228
    %301 = vmatpush.bf16.msra.mxu0 %v224
    %302 = vmatpush.bf16.msra.mxu0 %v220
    %303 = vmatpush.bf16.msra.mxu0 %v216
    %304 = vmatpush.bf16.msra.mxu0 %v212
    %305 = vmatpush.bf16.msra.mxu0 %v208
    %306 = vmatmul.bf16.gmra.mxu0 %v108
    %v307 = vpop.f32.mrf.mxu0
    %v308 = vadd.f32 0.0, %v307
    %v309 = vpop.f32.mrf.mxu0
    %v310 = vadd.f32 0.0, %v309
    %311 = vdwg.mxu0
    %312 = vmatpush.bf16.msra.mxu0 %v237
    %313 = vmatpush.bf16.msra.mxu0 %v233
    %314 = vmatpush.bf16.msra.mxu0 %v229
    %315 = vmatpush.bf16.msra.mxu0 %v225
    %316 = vmatpush.bf16.msra.mxu0 %v221
    %317 = vmatpush.bf16.msra.mxu0 %v217
    %318 = vmatpush.bf16.msra.mxu0 %v213
    %319 = vmatpush.bf16.msra.mxu0 %v209
    %320 = vmatmul.bf16.gmra.mxu0 %v108
    %v321 = vpop.f32.mrf.mxu0
    %v322 = vadd.f32 0.0, %v321
    %v323 = vpop.f32.mrf.mxu0
    %v324 = vadd.f32 0.0, %v323
    %325 = vdwg.mxu0
    %v326 = vmax.f32 %v280, 0.0
    %v327 = vmax.f32 %v294, 0.0
    %v328 = vmax.f32 %v308, 0.0
    %v329 = vmax.f32 %v322, 0.0
    %v330 = vmax.f32 %v282, 0.0
    %v331 = vmax.f32 %v296, 0.0
    %v332 = vmax.f32 %v310, 0.0
    %v333 = vmax.f32 %v324, 0.0
    %v334 = vpack.c.bf16 %v330, %v326
    %v335 = vpack.c.bf16 %v331, %v327
    %v336 = vpack.c.bf16 %v332, %v328
    %v337 = vpack.c.bf16 %v333, %v329
    %v338 = vld [vmem:[#allocation4] sm:$0xff]
    %v339 = vld [vmem:[#allocation4 + $0x8] sm:$0xf]
    %v340 = vld [vmem:[#allocation4 + $0xc] sm:$0xff]
    %v341 = vld [vmem:[#allocation4 + $0x14] sm:$0xf]
    %v342 = vld [vmem:[#allocation4 + $0x18] sm:$0xff]
    %v343 = vld [vmem:[#allocation4 + $0x20] sm:$0xf]
    %v344 = vld [vmem:[#allocation4 + $0x24] sm:$0xff]
    %v345 = vld [vmem:[#allocation4 + $0x2c] sm:$0xf]
    %v346 = vld [vmem:[#allocation4 + $0x30] sm:$0xff]
    %v347 = vld [vmem:[#allocation4 + $0x38] sm:$0xf]
    %v348 = vld [vmem:[#allocation4 + $0x3c] sm:$0xff]
    %v349 = vld [vmem:[#allocation4 + $0x44] sm:$0xf]
    %v350 = vld [vmem:[#allocation4 + $0x48] sm:$0xff]
    %v351 = vld [vmem:[#allocation4 + $0x50] sm:$0xf]
    %v352 = vld [vmem:[#allocation4 + $0x54] sm:$0xff]
    %v353 = vld [vmem:[#allocation4 + $0x5c] sm:$0xf]
    %v354 = vld [vmem:[#allocation4 + $0x60] sm:$0xff]
    %v355 = vld [vmem:[#allocation4 + $0x68] sm:$0xf]
    %v356 = vld [vmem:[#allocation4 + $0x6c] sm:$0xff]
    %v357 = vld [vmem:[#allocation4 + $0x74] sm:$0xf]
    %v358 = vld [vmem:[#allocation4 + $0x78] sm:$0xff]
    %v359 = vld [vmem:[#allocation4 + $0x80] sm:$0xf]
    %v360 = vld [vmem:[#allocation4 + $0x84] sm:$0xff]
    %v361 = vld [vmem:[#allocation4 + $0x8c] sm:$0xf]
    %v362 = vld [vmem:[#allocation4 + $0x90] sm:$0xff]
    %v363 = vld [vmem:[#allocation4 + $0x98] sm:$0xf]
    %v364 = vld [vmem:[#allocation4 + $0x9c] sm:$0xff]
    %v365 = vld [vmem:[#allocation4 + $0xa4] sm:$0xf]
    %v366 = vld [vmem:[#allocation4 + $0xa8] sm:$0xff]
    %v367 = vld [vmem:[#allocation4 + $0xb0] sm:$0xf]
    %v368 = vld [vmem:[#allocation4 + $0xb4] sm:$0xff]
    %v369 = vld [vmem:[#allocation4 + $0xbc] sm:$0xf]
    %v370 = vld [vmem:[#allocation4 + $0xc0] sm:$0xff]
    %v371 = vld [vmem:[#allocation4 + $0xc8] sm:$0xf]
    %v372 = vld [vmem:[#allocation4 + $0xcc] sm:$0xff]
    %v373 = vld [vmem:[#allocation4 + $0xd4] sm:$0xf]
    %v374 = vld [vmem:[#allocation4 + $0xd8] sm:$0xff]
    %v375 = vld [vmem:[#allocation4 + $0xe0] sm:$0xf]
    %v376 = vld [vmem:[#allocation4 + $0xe4] sm:$0xff]
    %v377 = vld [vmem:[#allocation4 + $0xec] sm:$0xf]
    %v378 = vld [vmem:[#allocation4 + $0xf0] sm:$0xff]
    %v379 = vld [vmem:[#allocation4 + $0xf8] sm:$0xf]
    %v380 = vld [vmem:[#allocation4 + $0xfc] sm:$0xff]
    %v381 = vld [vmem:[#allocation4 + $0x104] sm:$0xf]
    %v382 = vld [vmem:[#allocation4 + $0x108] sm:$0xff]
    %v383 = vld [vmem:[#allocation4 + $0x110] sm:$0xf]
    %v384 = vld [vmem:[#allocation4 + $0x114] sm:$0xff]
    %v385 = vld [vmem:[#allocation4 + $0x11c] sm:$0xf]
    %v386 = vld [vmem:[#allocation4 + $0x120] sm:$0xff]
    %v387 = vld [vmem:[#allocation4 + $0x128] sm:$0xf]
    %v388 = vld [vmem:[#allocation4 + $0x12c] sm:$0xff]
    %v389 = vld [vmem:[#allocation4 + $0x134] sm:$0xf]
    %v390 = vld [vmem:[#allocation4 + $0x138] sm:$0xff]
    %v391 = vld [vmem:[#allocation4 + $0x140] sm:$0xf]
    %v392 = vld [vmem:[#allocation4 + $0x144] sm:$0xff]
    %v393 = vld [vmem:[#allocation4 + $0x14c] sm:$0xf]
    %v394 = vld [vmem:[#allocation4 + $0x150] sm:$0xff]
    %v395 = vld [vmem:[#allocation4 + $0x158] sm:$0xf]
    %v396 = vld [vmem:[#allocation4 + $0x15c] sm:$0xff]
    %v397 = vld [vmem:[#allocation4 + $0x164] sm:$0xf]
    %v398 = vld [vmem:[#allocation4 + $0x168] sm:$0xff]
    %v399 = vld [vmem:[#allocation4 + $0x170] sm:$0xf]
    %v400 = vld [vmem:[#allocation4 + $0x174] sm:$0xff]
    %v401 = vld [vmem:[#allocation4 + $0x17c] sm:$0xf]
    %v402 = vld [vmem:[#allocation4 + $0x180] sm:$0xff]
    %v403 = vld [vmem:[#allocation4 + $0x188] sm:$0xf]
    %v404 = vld [vmem:[#allocation4 + $0x18c] sm:$0xff]
    %v405 = vld [vmem:[#allocation4 + $0x194] sm:$0xf]
    %v406 = vld [vmem:[#allocation4 + $0x198] sm:$0xff]
    %v407 = vld [vmem:[#allocation4 + $0x1a0] sm:$0xf]
    %v408 = vld [vmem:[#allocation4 + $0x1a4] sm:$0xff]
    %v409 = vld [vmem:[#allocation4 + $0x1ac] sm:$0xf]
    %v410 = vld [vmem:[#allocation4 + $0x1b0] sm:$0xff]
    %v411 = vld [vmem:[#allocation4 + $0x1b8] sm:$0xf]
    %v412 = vld [vmem:[#allocation4 + $0x1bc] sm:$0xff]
    %v413 = vld [vmem:[#allocation4 + $0x1c4] sm:$0xf]
    %v414 = vld [vmem:[#allocation4 + $0x1c8] sm:$0xff]
    %v415 = vld [vmem:[#allocation4 + $0x1d0] sm:$0xf]
    %v416 = vld [vmem:[#allocation4 + $0x1d4] sm:$0xff]
    %v417 = vld [vmem:[#allocation4 + $0x1dc] sm:$0xf]
    %v418 = vld [vmem:[#allocation4 + $0x1e0] sm:$0xff]
    %v419 = vld [vmem:[#allocation4 + $0x1e8] sm:$0xf]
    %v420 = vld [vmem:[#allocation4 + $0x1ec] sm:$0xff]
    %v421 = vld [vmem:[#allocation4 + $0x1f4] sm:$0xf]
    %v422 = vld [vmem:[#allocation4 + $0x1f8] sm:$0xff]
    %v423 = vld [vmem:[#allocation4 + $0x200] sm:$0xf]
    %v424 = vld [vmem:[#allocation4 + $0x204] sm:$0xff]
    %v425 = vld [vmem:[#allocation4 + $0x20c] sm:$0xf]
    %v426 = vld [vmem:[#allocation4 + $0x210] sm:$0xff]
    %v427 = vld [vmem:[#allocation4 + $0x218] sm:$0xf]
    %v428 = vld [vmem:[#allocation4 + $0x21c] sm:$0xff]
    %v429 = vld [vmem:[#allocation4 + $0x224] sm:$0xf]
    %v430 = vld [vmem:[#allocation4 + $0x228] sm:$0xff]
    %v431 = vld [vmem:[#allocation4 + $0x230] sm:$0xf]
    %v432 = vld [vmem:[#allocation4 + $0x234] sm:$0xff]
    %v433 = vld [vmem:[#allocation4 + $0x23c] sm:$0xf]
    %v434 = vld [vmem:[#allocation4 + $0x240] sm:$0xff]
    %v435 = vld [vmem:[#allocation4 + $0x248] sm:$0xf]
    %v436 = vld [vmem:[#allocation4 + $0x24c] sm:$0xff]
    %v437 = vld [vmem:[#allocation4 + $0x254] sm:$0xf]
    %v438 = vld [vmem:[#allocation4 + $0x258] sm:$0xff]
    %v439 = vld [vmem:[#allocation4 + $0x260] sm:$0xf]
    %v440 = vld [vmem:[#allocation4 + $0x264] sm:$0xff]
    %v441 = vld [vmem:[#allocation4 + $0x26c] sm:$0xf]
    %v442 = vld [vmem:[#allocation4 + $0x270] sm:$0xff]
    %v443 = vld [vmem:[#allocation4 + $0x278] sm:$0xf]
    %v444 = vld [vmem:[#allocation4 + $0x27c] sm:$0xff]
    %v445 = vld [vmem:[#allocation4 + $0x284] sm:$0xf]
    %v446 = vld [vmem:[#allocation4 + $0x288] sm:$0xff]
    %v447 = vld [vmem:[#allocation4 + $0x290] sm:$0xf]
    %v448 = vld [vmem:[#allocation4 + $0x294] sm:$0xff]
    %v449 = vld [vmem:[#allocation4 + $0x29c] sm:$0xf]
    %v450 = vld [vmem:[#allocation4 + $0x2a0] sm:$0xff]
    %v451 = vld [vmem:[#allocation4 + $0x2a8] sm:$0xf]
    %v452 = vld [vmem:[#allocation4 + $0x2ac] sm:$0xff]
    %v453 = vld [vmem:[#allocation4 + $0x2b4] sm:$0xf]
    %v454 = vld [vmem:[#allocation4 + $0x2b8] sm:$0xff]
    %v455 = vld [vmem:[#allocation4 + $0x2c0] sm:$0xf]
    %v456 = vld [vmem:[#allocation4 + $0x2c4] sm:$0xff]
    %v457 = vld [vmem:[#allocation4 + $0x2cc] sm:$0xf]
    %v458 = vld [vmem:[#allocation4 + $0x2d0] sm:$0xff]
    %v459 = vld [vmem:[#allocation4 + $0x2d8] sm:$0xf]
    %v460 = vld [vmem:[#allocation4 + $0x2dc] sm:$0xff]
    %v461 = vld [vmem:[#allocation4 + $0x2e4] sm:$0xf]
    %v462 = vld [vmem:[#allocation4 + $0x2e8] sm:$0xff]
    %v463 = vld [vmem:[#allocation4 + $0x2f0] sm:$0xf]
    %v464 = vld [vmem:[#allocation4 + $0x2f4] sm:$0xff]
    %v465 = vld [vmem:[#allocation4 + $0x2fc] sm:$0xf]
    %v594 = vunpack.c.l.b16 %v338
    %v595 = vunpack.c.h.b16 %v338
    %v596 = vunpack.c.l.b16 %v339
    %v597 = vunpack.c.l.b16 %v340
    %v598 = vunpack.c.h.b16 %v340
    %v599 = vunpack.c.l.b16 %v341
    %v600 = vunpack.c.l.b16 %v342
    %v601 = vunpack.c.h.b16 %v342
    %v602 = vunpack.c.l.b16 %v343
    %v603 = vunpack.c.l.b16 %v344
    %v604 = vunpack.c.h.b16 %v344
    %v605 = vunpack.c.l.b16 %v345
    %v606 = vunpack.c.l.b16 %v346
    %v607 = vunpack.c.h.b16 %v346
    %v608 = vunpack.c.l.b16 %v347
    %v609 = vunpack.c.l.b16 %v348
    %v610 = vunpack.c.h.b16 %v348
    %v611 = vunpack.c.l.b16 %v349
    %v612 = vunpack.c.l.b16 %v350
    %v613 = vunpack.c.h.b16 %v350
    %v614 = vunpack.c.l.b16 %v351
    %v615 = vunpack.c.l.b16 %v352
    %v616 = vunpack.c.h.b16 %v352
    %v617 = vunpack.c.l.b16 %v353
    %v618 = vunpack.c.l.b16 %v354
    %v619 = vunpack.c.h.b16 %v354
    %v620 = vunpack.c.l.b16 %v355
    %v621 = vunpack.c.l.b16 %v356
    %v622 = vunpack.c.h.b16 %v356
    %v623 = vunpack.c.l.b16 %v357
    %v624 = vunpack.c.l.b16 %v358
    %v625 = vunpack.c.h.b16 %v358
    %v626 = vunpack.c.l.b16 %v359
    %v627 = vunpack.c.l.b16 %v360
    %v628 = vunpack.c.h.b16 %v360
    %v629 = vunpack.c.l.b16 %v361
    %v630 = vunpack.c.l.b16 %v362
    %v631 = vunpack.c.h.b16 %v362
    %v632 = vunpack.c.l.b16 %v363
    %v633 = vunpack.c.l.b16 %v364
    %v634 = vunpack.c.h.b16 %v364
    %v635 = vunpack.c.l.b16 %v365
    %v636 = vunpack.c.l.b16 %v366
    %v637 = vunpack.c.h.b16 %v366
    %v638 = vunpack.c.l.b16 %v367
    %v639 = vunpack.c.l.b16 %v368
    %v640 = vunpack.c.h.b16 %v368
    %v641 = vunpack.c.l.b16 %v369
    %v642 = vunpack.c.l.b16 %v370
    %v643 = vunpack.c.h.b16 %v370
    %v644 = vunpack.c.l.b16 %v371
    %v645 = vunpack.c.l.b16 %v372
    %v646 = vunpack.c.h.b16 %v372
    %v647 = vunpack.c.l.b16 %v373
    %v648 = vunpack.c.l.b16 %v374
    %v649 = vunpack.c.h.b16 %v374
    %v650 = vunpack.c.l.b16 %v375
    %v651 = vunpack.c.l.b16 %v376
    %v652 = vunpack.c.h.b16 %v376
    %v653 = vunpack.c.l.b16 %v377
    %v654 = vunpack.c.l.b16 %v378
    %v655 = vunpack.c.h.b16 %v378
    %v656 = vunpack.c.l.b16 %v379
    %v657 = vunpack.c.l.b16 %v380
    %v658 = vunpack.c.h.b16 %v380
    %v659 = vunpack.c.l.b16 %v381
    %v660 = vunpack.c.l.b16 %v382
    %v661 = vunpack.c.h.b16 %v382
    %v662 = vunpack.c.l.b16 %v383
    %v663 = vunpack.c.l.b16 %v384
    %v664 = vunpack.c.h.b16 %v384
    %v665 = vunpack.c.l.b16 %v385
    %v666 = vunpack.c.l.b16 %v386
    %v667 = vunpack.c.h.b16 %v386
    %v668 = vunpack.c.l.b16 %v387
    %v669 = vunpack.c.l.b16 %v388
    %v670 = vunpack.c.h.b16 %v388
    %v671 = vunpack.c.l.b16 %v389
    %v672 = vunpack.c.l.b16 %v390
    %v673 = vunpack.c.h.b16 %v390
    %v674 = vunpack.c.l.b16 %v391
    %v675 = vunpack.c.l.b16 %v392
    %v676 = vunpack.c.h.b16 %v392
    %v677 = vunpack.c.l.b16 %v393
    %v678 = vunpack.c.l.b16 %v394
    %v679 = vunpack.c.h.b16 %v394
    %v680 = vunpack.c.l.b16 %v395
    %v681 = vunpack.c.l.b16 %v396
    %v682 = vunpack.c.h.b16 %v396
    %v683 = vunpack.c.l.b16 %v397
    %v684 = vunpack.c.l.b16 %v398
    %v685 = vunpack.c.h.b16 %v398
    %v686 = vunpack.c.l.b16 %v399
    %v687 = vunpack.c.l.b16 %v400
    %v688 = vunpack.c.h.b16 %v400
    %v689 = vunpack.c.l.b16 %v401
    %v690 = vunpack.c.l.b16 %v402
    %v691 = vunpack.c.h.b16 %v402
    %v692 = vunpack.c.l.b16 %v403
    %v693 = vunpack.c.l.b16 %v404
    %v694 = vunpack.c.h.b16 %v404
    %v695 = vunpack.c.l.b16 %v405
    %v696 = vunpack.c.l.b16 %v406
    %v697 = vunpack.c.h.b16 %v406
    %v698 = vunpack.c.l.b16 %v407
    %v699 = vunpack.c.l.b16 %v408
    %v700 = vunpack.c.h.b16 %v408
    %v701 = vunpack.c.l.b16 %v409
    %v702 = vunpack.c.l.b16 %v410
    %v703 = vunpack.c.h.b16 %v410
    %v704 = vunpack.c.l.b16 %v411
    %v705 = vunpack.c.l.b16 %v412
    %v706 = vunpack.c.h.b16 %v412
    %v707 = vunpack.c.l.b16 %v413
    %v708 = vunpack.c.l.b16 %v414
    %v709 = vunpack.c.h.b16 %v414
    %v710 = vunpack.c.l.b16 %v415
    %v711 = vunpack.c.l.b16 %v416
    %v712 = vunpack.c.h.b16 %v416
    %v713 = vunpack.c.l.b16 %v417
    %v714 = vunpack.c.l.b16 %v418
    %v715 = vunpack.c.h.b16 %v418
    %v716 = vunpack.c.l.b16 %v419
    %v717 = vunpack.c.l.b16 %v420
    %v718 = vunpack.c.h.b16 %v420
    %v719 = vunpack.c.l.b16 %v421
    %v720 = vunpack.c.l.b16 %v422
    %v721 = vunpack.c.h.b16 %v422
    %v722 = vunpack.c.l.b16 %v423
    %v723 = vunpack.c.l.b16 %v424
    %v724 = vunpack.c.h.b16 %v424
    %v725 = vunpack.c.l.b16 %v425
    %v726 = vunpack.c.l.b16 %v426
    %v727 = vunpack.c.h.b16 %v426
    %v728 = vunpack.c.l.b16 %v427
    %v729 = vunpack.c.l.b16 %v428
    %v730 = vunpack.c.h.b16 %v428
    %v731 = vunpack.c.l.b16 %v429
    %v732 = vunpack.c.l.b16 %v430
    %v733 = vunpack.c.h.b16 %v430
    %v734 = vunpack.c.l.b16 %v431
    %v735 = vunpack.c.l.b16 %v432
    %v736 = vunpack.c.h.b16 %v432
    %v737 = vunpack.c.l.b16 %v433
    %v738 = vunpack.c.l.b16 %v434
    %v739 = vunpack.c.h.b16 %v434
    %v740 = vunpack.c.l.b16 %v435
    %v741 = vunpack.c.l.b16 %v436
    %v742 = vunpack.c.h.b16 %v436
    %v743 = vunpack.c.l.b16 %v437
    %v744 = vunpack.c.l.b16 %v438
    %v745 = vunpack.c.h.b16 %v438
    %v746 = vunpack.c.l.b16 %v439
    %v747 = vunpack.c.l.b16 %v440
    %v748 = vunpack.c.h.b16 %v440
    %v749 = vunpack.c.l.b16 %v441
    %v750 = vunpack.c.l.b16 %v442
    %v751 = vunpack.c.h.b16 %v442
    %v752 = vunpack.c.l.b16 %v443
    %v753 = vunpack.c.l.b16 %v444
    %v754 = vunpack.c.h.b16 %v444
    %v755 = vunpack.c.l.b16 %v445
    %v756 = vunpack.c.l.b16 %v446
    %v757 = vunpack.c.h.b16 %v446
    %v758 = vunpack.c.l.b16 %v447
    %v759 = vunpack.c.l.b16 %v448
    %v760 = vunpack.c.h.b16 %v448
    %v761 = vunpack.c.l.b16 %v449
    %v762 = vunpack.c.l.b16 %v450
    %v763 = vunpack.c.h.b16 %v450
    %v764 = vunpack.c.l.b16 %v451
    %v765 = vunpack.c.l.b16 %v452
    %v766 = vunpack.c.h.b16 %v452
    %v767 = vunpack.c.l.b16 %v453
    %v768 = vunpack.c.l.b16 %v454
    %v769 = vunpack.c.h.b16 %v454
    %v770 = vunpack.c.l.b16 %v455
    %v771 = vunpack.c.l.b16 %v456
    %v772 = vunpack.c.h.b16 %v456
    %v773 = vunpack.c.l.b16 %v457
    %v774 = vunpack.c.l.b16 %v458
    %v775 = vunpack.c.h.b16 %v458
    %v776 = vunpack.c.l.b16 %v459
    %v777 = vunpack.c.l.b16 %v460
    %v778 = vunpack.c.h.b16 %v460
    %v779 = vunpack.c.l.b16 %v461
    %v780 = vunpack.c.l.b16 %v462
    %v781 = vunpack.c.h.b16 %v462
    %v782 = vunpack.c.l.b16 %v463
    %v783 = vunpack.c.l.b16 %v464
    %v784 = vunpack.c.h.b16 %v464
    %v785 = vunpack.c.l.b16 %v465
    %v786 = vpack.c.b16 %v597, %v594
    %v787 = vpack.c.b16 %v598, %v595
    %v788 = vpack.c.b16 %v599, %v596
    %v789 = vpack.c.b16 %v603, %v600
    %v790 = vpack.c.b16 %v604, %v601
    %v791 = vpack.c.b16 %v605, %v602
    %v792 = vpack.c.b16 %v609, %v606
    %v793 = vpack.c.b16 %v610, %v607
    %v794 = vpack.c.b16 %v611, %v608
    %v795 = vpack.c.b16 %v615, %v612
    %v796 = vpack.c.b16 %v616, %v613
    %v797 = vpack.c.b16 %v617, %v614
    %v798 = vpack.c.b16 %v621, %v618
    %v799 = vpack.c.b16 %v622, %v619
    %v800 = vpack.c.b16 %v623, %v620
    %v801 = vpack.c.b16 %v627, %v624
    %v802 = vpack.c.b16 %v628, %v625
    %v803 = vpack.c.b16 %v629, %v626
    %v804 = vpack.c.b16 %v633, %v630
    %v805 = vpack.c.b16 %v634, %v631
    %v806 = vpack.c.b16 %v635, %v632
    %v807 = vpack.c.b16 %v639, %v636
    %v808 = vpack.c.b16 %v640, %v637
    %v809 = vpack.c.b16 %v641, %v638
    %v810 = vpack.c.b16 %v645, %v642
    %v811 = vpack.c.b16 %v646, %v643
    %v812 = vpack.c.b16 %v647, %v644
    %v813 = vpack.c.b16 %v651, %v648
    %v814 = vpack.c.b16 %v652, %v649
    %v815 = vpack.c.b16 %v653, %v650
    %v816 = vpack.c.b16 %v657, %v654
    %v817 = vpack.c.b16 %v658, %v655
    %v818 = vpack.c.b16 %v659, %v656
    %v819 = vpack.c.b16 %v663, %v660
    %v820 = vpack.c.b16 %v664, %v661
    %v821 = vpack.c.b16 %v665, %v662
    %v822 = vpack.c.b16 %v669, %v666
    %v823 = vpack.c.b16 %v670, %v667
    %v824 = vpack.c.b16 %v671, %v668
    %v825 = vpack.c.b16 %v675, %v672
    %v826 = vpack.c.b16 %v676, %v673
    %v827 = vpack.c.b16 %v677, %v674
    %v828 = vpack.c.b16 %v681, %v678
    %v829 = vpack.c.b16 %v682, %v679
    %v830 = vpack.c.b16 %v683, %v680
    %v831 = vpack.c.b16 %v687, %v684
    %v832 = vpack.c.b16 %v688, %v685
    %v833 = vpack.c.b16 %v689, %v686
    %v834 = vpack.c.b16 %v693, %v690
    %v835 = vpack.c.b16 %v694, %v691
    %v836 = vpack.c.b16 %v695, %v692
    %v837 = vpack.c.b16 %v699, %v696
    %v838 = vpack.c.b16 %v700, %v697
    %v839 = vpack.c.b16 %v701, %v698
    %v840 = vpack.c.b16 %v705, %v702
    %v841 = vpack.c.b16 %v706, %v703
    %v842 = vpack.c.b16 %v707, %v704
    %v843 = vpack.c.b16 %v711, %v708
    %v844 = vpack.c.b16 %v712, %v709
    %v845 = vpack.c.b16 %v713, %v710
    %v846 = vpack.c.b16 %v717, %v714
    %v847 = vpack.c.b16 %v718, %v715
    %v848 = vpack.c.b16 %v719, %v716
    %v849 = vpack.c.b16 %v723, %v720
    %v850 = vpack.c.b16 %v724, %v721
    %v851 = vpack.c.b16 %v725, %v722
    %v852 = vpack.c.b16 %v729, %v726
    %v853 = vpack.c.b16 %v730, %v727
    %v854 = vpack.c.b16 %v731, %v728
    %v855 = vpack.c.b16 %v735, %v732
    %v856 = vpack.c.b16 %v736, %v733
    %v857 = vpack.c.b16 %v737, %v734
    %v858 = vpack.c.b16 %v741, %v738
    %v859 = vpack.c.b16 %v742, %v739
    %v860 = vpack.c.b16 %v743, %v740
    %v861 = vpack.c.b16 %v747, %v744
    %v862 = vpack.c.b16 %v748, %v745
    %v863 = vpack.c.b16 %v749, %v746
    %v864 = vpack.c.b16 %v753, %v750
    %v865 = vpack.c.b16 %v754, %v751
    %v866 = vpack.c.b16 %v755, %v752
    %v867 = vpack.c.b16 %v759, %v756
    %v868 = vpack.c.b16 %v760, %v757
    %v869 = vpack.c.b16 %v761, %v758
    %v870 = vpack.c.b16 %v765, %v762
    %v871 = vpack.c.b16 %v766, %v763
    %v872 = vpack.c.b16 %v767, %v764
    %v873 = vpack.c.b16 %v771, %v768
    %v874 = vpack.c.b16 %v772, %v769
    %v875 = vpack.c.b16 %v773, %v770
    %v876 = vpack.c.b16 %v777, %v774
    %v877 = vpack.c.b16 %v778, %v775
    %v878 = vpack.c.b16 %v779, %v776
    %v879 = vpack.c.b16 %v783, %v780
    %v880 = vpack.c.b16 %v784, %v781
    %v881 = vpack.c.b16 %v785, %v782
    %978 = vmatpush.bf16.msra.mxu0 %v807
    %979 = vmatpush.bf16.msra.mxu0 %v804
    %980 = vmatpush.bf16.msra.mxu0 %v801
    %981 = vmatpush.bf16.msra.mxu0 %v798
    %982 = vmatpush.bf16.msra.mxu0 %v795
    %983 = vmatpush.bf16.msra.mxu0 %v792
    %984 = vmatpush.bf16.msra.mxu0 %v789
    %985 = vmatpush.bf16.msra.mxu0 %v786
    %986 = vmatmul.bf16.gmra.mxu0 %v334
    %v987 = vpop.f32.mrf.mxu0
    %v988 = vadd.f32 0.0, %v987
    %v989 = vpop.f32.mrf.mxu0
    %v990 = vadd.f32 0.0, %v989
    %991 = vdwg.mxu0
    %992 = vmatpush.bf16.msra.mxu0 %v831
    %993 = vmatpush.bf16.msra.mxu0 %v828
    %994 = vmatpush.bf16.msra.mxu0 %v825
    %995 = vmatpush.bf16.msra.mxu0 %v822
    %996 = vmatpush.bf16.msra.mxu0 %v819
    %997 = vmatpush.bf16.msra.mxu0 %v816
    %998 = vmatpush.bf16.msra.mxu0 %v813
    %999 = vmatpush.bf16.msra.mxu0 %v810
    %1000 = vmatmul.bf16.gmra.mxu0 %v335
    %v1001 = vpop.f32.mrf.mxu0
    %v1002 = vadd.f32 %v988, %v1001
    %v1003 = vpop.f32.mrf.mxu0
    %v1004 = vadd.f32 %v990, %v1003
    %1005 = vdwg.mxu0
    %1006 = vmatpush.bf16.msra.mxu0 %v855
    %1007 = vmatpush.bf16.msra.mxu0 %v852
    %1008 = vmatpush.bf16.msra.mxu0 %v849
    %1009 = vmatpush.bf16.msra.mxu0 %v846
    %1010 = vmatpush.bf16.msra.mxu0 %v843
    %1011 = vmatpush.bf16.msra.mxu0 %v840
    %1012 = vmatpush.bf16.msra.mxu0 %v837
    %1013 = vmatpush.bf16.msra.mxu0 %v834
    %1014 = vmatmul.bf16.gmra.mxu0 %v336
    %v1015 = vpop.f32.mrf.mxu0
    %v1016 = vadd.f32 %v1002, %v1015
    %v1017 = vpop.f32.mrf.mxu0
    %v1018 = vadd.f32 %v1004, %v1017
    %1019 = vdwg.mxu0
    %1020 = vmatpush.bf16.msra.mxu0 %v879
    %1021 = vmatpush.bf16.msra.mxu0 %v876
    %1022 = vmatpush.bf16.msra.mxu0 %v873
    %1023 = vmatpush.bf16.msra.mxu0 %v870
    %1024 = vmatpush.bf16.msra.mxu0 %v867
    %1025 = vmatpush.bf16.msra.mxu0 %v864
    %1026 = vmatpush.bf16.msra.mxu0 %v861
    %1027 = vmatpush.bf16.msra.mxu0 %v858
    %1028 = vmatmul.bf16.gmra.mxu0 %v337
    %v1029 = vpop.f32.mrf.mxu0
    %v1030 = vadd.f32 %v1016, %v1029
    %v1031 = vpop.f32.mrf.mxu0
    %v1032 = vadd.f32 %v1018, %v1031
    %1033 = vdwg.mxu0
    %1034 = vmatpush.bf16.msra.mxu0 %v808
    %1035 = vmatpush.bf16.msra.mxu0 %v805
    %1036 = vmatpush.bf16.msra.mxu0 %v802
    %1037 = vmatpush.bf16.msra.mxu0 %v799
    %1038 = vmatpush.bf16.msra.mxu0 %v796
    %1039 = vmatpush.bf16.msra.mxu0 %v793
    %1040 = vmatpush.bf16.msra.mxu0 %v790
    %1041 = vmatpush.bf16.msra.mxu0 %v787
    %1042 = vmatmul.bf16.gmra.mxu0 %v334
    %v1043 = vpop.f32.mrf.mxu0
    %v1044 = vadd.f32 0.0, %v1043
    %v1045 = vpop.f32.mrf.mxu0
    %v1046 = vadd.f32 0.0, %v1045
    %1047 = vdwg.mxu0
    %1048 = vmatpush.bf16.msra.mxu0 %v832
    %1049 = vmatpush.bf16.msra.mxu0 %v829
    %1050 = vmatpush.bf16.msra.mxu0 %v826
    %1051 = vmatpush.bf16.msra.mxu0 %v823
    %1052 = vmatpush.bf16.msra.mxu0 %v820
    %1053 = vmatpush.bf16.msra.mxu0 %v817
    %1054 = vmatpush.bf16.msra.mxu0 %v814
    %1055 = vmatpush.bf16.msra.mxu0 %v811
    %1056 = vmatmul.bf16.gmra.mxu0 %v335
    %v1057 = vpop.f32.mrf.mxu0
    %v1058 = vadd.f32 %v1044, %v1057
    %v1059 = vpop.f32.mrf.mxu0
    %v1060 = vadd.f32 %v1046, %v1059
    %1061 = vdwg.mxu0
    %1062 = vmatpush.bf16.msra.mxu0 %v856
    %1063 = vmatpush.bf16.msra.mxu0 %v853
    %1064 = vmatpush.bf16.msra.mxu0 %v850
    %1065 = vmatpush.bf16.msra.mxu0 %v847
    %1066 = vmatpush.bf16.msra.mxu0 %v844
    %1067 = vmatpush.bf16.msra.mxu0 %v841
    %1068 = vmatpush.bf16.msra.mxu0 %v838
    %1069 = vmatpush.bf16.msra.mxu0 %v835
    %1070 = vmatmul.bf16.gmra.mxu0 %v336
    %v1071 = vpop.f32.mrf.mxu0
    %v1072 = vadd.f32 %v1058, %v1071
    %v1073 = vpop.f32.mrf.mxu0
    %v1074 = vadd.f32 %v1060, %v1073
    %1075 = vdwg.mxu0
    %1076 = vmatpush.bf16.msra.mxu0 %v880
    %1077 = vmatpush.bf16.msra.mxu0 %v877
    %1078 = vmatpush.bf16.msra.mxu0 %v874
    %1079 = vmatpush.bf16.msra.mxu0 %v871
    %1080 = vmatpush.bf16.msra.mxu0 %v868
    %1081 = vmatpush.bf16.msra.mxu0 %v865
    %1082 = vmatpush.bf16.msra.mxu0 %v862
    %1083 = vmatpush.bf16.msra.mxu0 %v859
    %1084 = vmatmul.bf16.gmra.mxu0 %v337
    %v1085 = vpop.f32.mrf.mxu0
    %v1086 = vadd.f32 %v1072, %v1085
    %v1087 = vpop.f32.mrf.mxu0
    %v1088 = vadd.f32 %v1074, %v1087
    %1089 = vdwg.mxu0
    %1090 = vmatpush.bf16.msra.mxu0 %v809
    %1091 = vmatpush.bf16.msra.mxu0 %v806
    %1092 = vmatpush.bf16.msra.mxu0 %v803
    %1093 = vmatpush.bf16.msra.mxu0 %v800
    %1094 = vmatpush.bf16.msra.mxu0 %v797
    %1095 = vmatpush.bf16.msra.mxu0 %v794
    %1096 = vmatpush.bf16.msra.mxu0 %v791
    %1097 = vmatpush.bf16.msra.mxu0 %v788
    %1098 = vmatmul.bf16.gmra.mxu0 %v334
    %v1099 = vpop.f32.mrf.mxu0
    %v1100 = vadd.f32 0.0, %v1099
    %v1101 = vpop.f32.mrf.mxu0
    %v1102 = vadd.f32 0.0, %v1101
    %1103 = vdwg.mxu0
    %1104 = vmatpush.bf16.msra.mxu0 %v833
    %1105 = vmatpush.bf16.msra.mxu0 %v830
    %1106 = vmatpush.bf16.msra.mxu0 %v827
    %1107 = vmatpush.bf16.msra.mxu0 %v824
    %1108 = vmatpush.bf16.msra.mxu0 %v821
    %1109 = vmatpush.bf16.msra.mxu0 %v818
    %1110 = vmatpush.bf16.msra.mxu0 %v815
    %1111 = vmatpush.bf16.msra.mxu0 %v812
    %1112 = vmatmul.bf16.gmra.mxu0 %v335
    %v1113 = vpop.f32.mrf.mxu0
    %v1114 = vadd.f32 %v1100, %v1113
    %v1115 = vpop.f32.mrf.mxu0
    %v1116 = vadd.f32 %v1102, %v1115
    %1117 = vdwg.mxu0
    %1118 = vmatpush.bf16.msra.mxu0 %v857
    %1119 = vmatpush.bf16.msra.mxu0 %v854
    %1120 = vmatpush.bf16.msra.mxu0 %v851
    %1121 = vmatpush.bf16.msra.mxu0 %v848
    %1122 = vmatpush.bf16.msra.mxu0 %v845
    %1123 = vmatpush.bf16.msra.mxu0 %v842
    %1124 = vmatpush.bf16.msra.mxu0 %v839
    %1125 = vmatpush.bf16.msra.mxu0 %v836
    %1126 = vmatmul.bf16.gmra.mxu0 %v336
    %v1127 = vpop.f32.mrf.mxu0
    %v1128 = vadd.f32 %v1114, %v1127
    %v1129 = vpop.f32.mrf.mxu0
    %v1130 = vadd.f32 %v1116, %v1129
    %1131 = vdwg.mxu0
    %1132 = vmatpush.bf16.msra.mxu0 %v881
    %1133 = vmatpush.bf16.msra.mxu0 %v878
    %1134 = vmatpush.bf16.msra.mxu0 %v875
    %1135 = vmatpush.bf16.msra.mxu0 %v872
    %1136 = vmatpush.bf16.msra.mxu0 %v869
    %1137 = vmatpush.bf16.msra.mxu0 %v866
    %1138 = vmatpush.bf16.msra.mxu0 %v863
    %1139 = vmatpush.bf16.msra.mxu0 %v860
    %1140 = vmatmul.bf16.gmra.mxu0 %v337
    %v1141 = vpop.f32.mrf.mxu0
    %v1142 = vadd.f32 %v1128, %v1141
    %v1143 = vpop.f32.mrf.mxu0
    %v1144 = vadd.f32 %v1130, %v1143
    %1145 = vdwg.mxu0
    %v1146 = vmax.f32 %v1030, 0.0
    %v1147 = vmax.f32 %v1086, 0.0
    %v1148 = vmax.f32 %v1142, 0.0
    %v1149 = vmax.f32 %v1032, 0.0
    %v1150 = vmax.f32 %v1088, 0.0
    %v1151 = vmax.f32 %v1144, 0.0
    %v1152 = vpack.c.bf16 %v1149, %v1146
    %v1153 = vpack.c.bf16 %v1150, %v1147
    %v1154 = vpack.c.bf16 %v1151, %v1148
    %v1155 = vld [vmem:[#allocation6] sm:$0xf]
    %v1156 = vld [vmem:[#allocation6 + $0x4] sm:$0xf]
    %v1157 = vld [vmem:[#allocation6 + $0x8] sm:$0xf]
    %v1158 = vld [vmem:[#allocation6 + $0xc] sm:$0xf]
    %v1159 = vld [vmem:[#allocation6 + $0x10] sm:$0xf]
    %v1160 = vld [vmem:[#allocation6 + $0x14] sm:$0xf]
    %v1161 = vld [vmem:[#allocation6 + $0x18] sm:$0xf]
    %v1162 = vld [vmem:[#allocation6 + $0x1c] sm:$0xf]
    %v1163 = vld [vmem:[#allocation6 + $0x20] sm:$0xf]
    %v1164 = vld [vmem:[#allocation6 + $0x24] sm:$0xf]
    %v1165 = vld [vmem:[#allocation6 + $0x28] sm:$0xf]
    %v1166 = vld [vmem:[#allocation6 + $0x2c] sm:$0xf]
    %v1167 = vld [vmem:[#allocation6 + $0x30] sm:$0xf]
    %v1168 = vld [vmem:[#allocation6 + $0x34] sm:$0xf]
    %v1169 = vld [vmem:[#allocation6 + $0x38] sm:$0xf]
    %v1170 = vld [vmem:[#allocation6 + $0x3c] sm:$0xf]
    %v1171 = vld [vmem:[#allocation6 + $0x40] sm:$0xf]
    %v1172 = vld [vmem:[#allocation6 + $0x44] sm:$0xf]
    %v1173 = vld [vmem:[#allocation6 + $0x48] sm:$0xf]
    %v1174 = vld [vmem:[#allocation6 + $0x4c] sm:$0xf]
    %v1175 = vld [vmem:[#allocation6 + $0x50] sm:$0xf]
    %v1176 = vld [vmem:[#allocation6 + $0x54] sm:$0xf]
    %v1177 = vld [vmem:[#allocation6 + $0x58] sm:$0xf]
    %v1178 = vld [vmem:[#allocation6 + $0x5c] sm:$0xf]
    %v1179 = vld [vmem:[#allocation6 + $0x60] sm:$0xf]
    %v1180 = vld [vmem:[#allocation6 + $0x64] sm:$0xf]
    %v1181 = vld [vmem:[#allocation6 + $0x68] sm:$0xf]
    %v1182 = vld [vmem:[#allocation6 + $0x6c] sm:$0xf]
    %v1183 = vld [vmem:[#allocation6 + $0x70] sm:$0xf]
    %v1184 = vld [vmem:[#allocation6 + $0x74] sm:$0xf]
    %v1185 = vld [vmem:[#allocation6 + $0x78] sm:$0xf]
    %v1186 = vld [vmem:[#allocation6 + $0x7c] sm:$0xf]
    %v1187 = vld [vmem:[#allocation6 + $0x80] sm:$0xf]
    %v1188 = vld [vmem:[#allocation6 + $0x84] sm:$0xf]
    %v1189 = vld [vmem:[#allocation6 + $0x88] sm:$0xf]
    %v1190 = vld [vmem:[#allocation6 + $0x8c] sm:$0xf]
    %v1191 = vld [vmem:[#allocation6 + $0x90] sm:$0xf]
    %v1192 = vld [vmem:[#allocation6 + $0x94] sm:$0xf]
    %v1193 = vld [vmem:[#allocation6 + $0x98] sm:$0xf]
    %v1194 = vld [vmem:[#allocation6 + $0x9c] sm:$0xf]
    %v1195 = vld [vmem:[#allocation6 + $0xa0] sm:$0xf]
    %v1196 = vld [vmem:[#allocation6 + $0xa4] sm:$0xf]
    %v1197 = vld [vmem:[#allocation6 + $0xa8] sm:$0xf]
    %v1198 = vld [vmem:[#allocation6 + $0xac] sm:$0xf]
    %v1199 = vld [vmem:[#allocation6 + $0xb0] sm:$0xf]
    %v1200 = vld [vmem:[#allocation6 + $0xb4] sm:$0xf]
    %v1201 = vld [vmem:[#allocation6 + $0xb8] sm:$0xf]
    %v1202 = vld [vmem:[#allocation6 + $0xbc] sm:$0xf]
    %v1251 = vunpack.c.l.b16 %v1155
    %v1252 = vunpack.c.l.b16 %v1156
    %v1253 = vunpack.c.l.b16 %v1157
    %v1254 = vunpack.c.l.b16 %v1158
    %v1255 = vunpack.c.l.b16 %v1159
    %v1256 = vunpack.c.l.b16 %v1160
    %v1257 = vunpack.c.l.b16 %v1161
    %v1258 = vunpack.c.l.b16 %v1162
    %v1259 = vunpack.c.l.b16 %v1163
    %v1260 = vunpack.c.l.b16 %v1164
    %v1261 = vunpack.c.l.b16 %v1165
    %v1262 = vunpack.c.l.b16 %v1166
    %v1263 = vunpack.c.l.b16 %v1167
    %v1264 = vunpack.c.l.b16 %v1168
    %v1265 = vunpack.c.l.b16 %v1169
    %v1266 = vunpack.c.l.b16 %v1170
    %v1267 = vunpack.c.l.b16 %v1171
    %v1268 = vunpack.c.l.b16 %v1172
    %v1269 = vunpack.c.l.b16 %v1173
    %v1270 = vunpack.c.l.b16 %v1174
    %v1271 = vunpack.c.l.b16 %v1175
    %v1272 = vunpack.c.l.b16 %v1176
    %v1273 = vunpack.c.l.b16 %v1177
    %v1274 = vunpack.c.l.b16 %v1178
    %v1275 = vunpack.c.l.b16 %v1179
    %v1276 = vunpack.c.l.b16 %v1180
    %v1277 = vunpack.c.l.b16 %v1181
    %v1278 = vunpack.c.l.b16 %v1182
    %v1279 = vunpack.c.l.b16 %v1183
    %v1280 = vunpack.c.l.b16 %v1184
    %v1281 = vunpack.c.l.b16 %v1185
    %v1282 = vunpack.c.l.b16 %v1186
    %v1283 = vunpack.c.l.b16 %v1187
    %v1284 = vunpack.c.l.b16 %v1188
    %v1285 = vunpack.c.l.b16 %v1189
    %v1286 = vunpack.c.l.b16 %v1190
    %v1287 = vunpack.c.l.b16 %v1191
    %v1288 = vunpack.c.l.b16 %v1192
    %v1289 = vunpack.c.l.b16 %v1193
    %v1290 = vunpack.c.l.b16 %v1194
    %v1291 = vunpack.c.l.b16 %v1195
    %v1292 = vunpack.c.l.b16 %v1196
    %v1293 = vunpack.c.l.b16 %v1197
    %v1294 = vunpack.c.l.b16 %v1198
    %v1295 = vunpack.c.l.b16 %v1199
    %v1296 = vunpack.c.l.b16 %v1200
    %v1297 = vunpack.c.l.b16 %v1201
    %v1298 = vunpack.c.l.b16 %v1202
    %v1299 = vpack.c.b16 %v1252, %v1251
    %v1300 = vpack.c.b16 %v1254, %v1253
    %v1301 = vpack.c.b16 %v1256, %v1255
    %v1302 = vpack.c.b16 %v1258, %v1257
    %v1303 = vpack.c.b16 %v1260, %v1259
    %v1304 = vpack.c.b16 %v1262, %v1261
    %v1305 = vpack.c.b16 %v1264, %v1263
    %v1306 = vpack.c.b16 %v1266, %v1265
    %v1307 = vpack.c.b16 %v1268, %v1267
    %v1308 = vpack.c.b16 %v1270, %v1269
    %v1309 = vpack.c.b16 %v1272, %v1271
    %v1310 = vpack.c.b16 %v1274, %v1273
    %v1311 = vpack.c.b16 %v1276, %v1275
    %v1312 = vpack.c.b16 %v1278, %v1277
    %v1313 = vpack.c.b16 %v1280, %v1279
    %v1314 = vpack.c.b16 %v1282, %v1281
    %v1315 = vpack.c.b16 %v1284, %v1283
    %v1316 = vpack.c.b16 %v1286, %v1285
    %v1317 = vpack.c.b16 %v1288, %v1287
    %v1318 = vpack.c.b16 %v1290, %v1289
    %v1319 = vpack.c.b16 %v1292, %v1291
    %v1320 = vpack.c.b16 %v1294, %v1293
    %v1321 = vpack.c.b16 %v1296, %v1295
    %v1322 = vpack.c.b16 %v1298, %v1297
    %1347 = vmatpush.bf16.msra.mxu0 %v1306
    %1348 = vmatpush.bf16.msra.mxu0 %v1305
    %1349 = vmatpush.bf16.msra.mxu0 %v1304
    %1350 = vmatpush.bf16.msra.mxu0 %v1303
    %1351 = vmatpush.bf16.msra.mxu0 %v1302
    %1352 = vmatpush.bf16.msra.mxu0 %v1301
    %1353 = vmatpush.bf16.msra.mxu0 %v1300
    %1354 = vmatpush.bf16.msra.mxu0 %v1299
    %1355 = vmatmul.bf16.gmra.mxu0 %v1152
    %v1356 = vpop.f32.mrf.mxu0
    %v1357 = vadd.f32 0.0, %v1356
    %v1358 = vpop.f32.mrf.mxu0
    %v1359 = vadd.f32 0.0, %v1358
    %1360 = vdwg.mxu0
    %1361 = vmatpush.bf16.msra.mxu0 %v1314
    %1362 = vmatpush.bf16.msra.mxu0 %v1313
    %1363 = vmatpush.bf16.msra.mxu0 %v1312
    %1364 = vmatpush.bf16.msra.mxu0 %v1311
    %1365 = vmatpush.bf16.msra.mxu0 %v1310
    %1366 = vmatpush.bf16.msra.mxu0 %v1309
    %1367 = vmatpush.bf16.msra.mxu0 %v1308
    %1368 = vmatpush.bf16.msra.mxu0 %v1307
    %1369 = vmatmul.bf16.gmra.mxu0 %v1153
    %v1370 = vpop.f32.mrf.mxu0
    %v1371 = vadd.f32 %v1357, %v1370
    %v1372 = vpop.f32.mrf.mxu0
    %v1373 = vadd.f32 %v1359, %v1372
    %1374 = vdwg.mxu0
    %1375 = vmatpush.bf16.msra.mxu0 %v1322
    %1376 = vmatpush.bf16.msra.mxu0 %v1321
    %1377 = vmatpush.bf16.msra.mxu0 %v1320
    %1378 = vmatpush.bf16.msra.mxu0 %v1319
    %1379 = vmatpush.bf16.msra.mxu0 %v1318
    %1380 = vmatpush.bf16.msra.mxu0 %v1317
    %1381 = vmatpush.bf16.msra.mxu0 %v1316
    %1382 = vmatpush.bf16.msra.mxu0 %v1315
    %1383 = vmatmul.bf16.gmra.mxu0 %v1154
    %v1384 = vpop.f32.mrf.mxu0
    %v1385 = vadd.f32 %v1371, %v1384
    %v1386 = vpop.f32.mrf.mxu0
    %v1387 = vadd.f32 %v1373, %v1386
    %1388 = vdwg.mxu0
    %v1389 = vmax.f32 %v1385, 0.0
    %v1390 = vmax.f32 %v1387, 0.0
    %v1391 = vpack.c.bf16 %v1390, %v1389
    %v1392 = vld [vmem:[%s4] sm:$0xf]
    %v1393 = vld [vmem:[%s4 + $0x4] sm:$0xf]
    %v1394 = vld [vmem:[%s4 + $0x8] sm:$0xf]
    %v1395 = vld [vmem:[%s4 + $0xc] sm:$0xf]
    %v1396 = vld [vmem:[%s4 + $0x10] sm:$0xf]
    %v1397 = vld [vmem:[%s4 + $0x14] sm:$0xf]
    %v1398 = vld [vmem:[%s4 + $0x18] sm:$0xf]
    %v1399 = vld [vmem:[%s4 + $0x1c] sm:$0xf]
    %v1400 = vld [vmem:[%s4 + $0x20] sm:$0xf]
    %v1401 = vld [vmem:[%s4 + $0x24] sm:$0xf]
    %v1402 = vld [vmem:[%s4 + $0x28] sm:$0xf]
    %v1403 = vld [vmem:[%s4 + $0x2c] sm:$0xf]
    %v1404 = vld [vmem:[%s4 + $0x30] sm:$0xf]
    %v1405 = vld [vmem:[%s4 + $0x34] sm:$0xf]
    %v1406 = vld [vmem:[%s4 + $0x38] sm:$0xf]
    %v1407 = vld [vmem:[%s4 + $0x3c] sm:$0xf]
    %v1424 = vunpack.c.l.b16 %v1392
    %v1425 = vunpack.c.l.b16 %v1393
    %v1426 = vunpack.c.l.b16 %v1394
    %v1427 = vunpack.c.l.b16 %v1395
    %v1428 = vunpack.c.l.b16 %v1396
    %v1429 = vunpack.c.l.b16 %v1397
    %v1430 = vunpack.c.l.b16 %v1398
    %v1431 = vunpack.c.l.b16 %v1399
    %v1432 = vunpack.c.l.b16 %v1400
    %v1433 = vunpack.c.l.b16 %v1401
    %v1434 = vunpack.c.l.b16 %v1402
    %v1435 = vunpack.c.l.b16 %v1403
    %v1436 = vunpack.c.l.b16 %v1404
    %v1437 = vunpack.c.l.b16 %v1405
    %v1438 = vunpack.c.l.b16 %v1406
    %v1439 = vunpack.c.l.b16 %v1407
    %v1440 = vpack.c.b16 %v1425, %v1424
    %v1441 = vpack.c.b16 %v1427, %v1426
    %v1442 = vpack.c.b16 %v1429, %v1428
    %v1443 = vpack.c.b16 %v1431, %v1430
    %v1444 = vpack.c.b16 %v1433, %v1432
    %v1445 = vpack.c.b16 %v1435, %v1434
    %v1446 = vpack.c.b16 %v1437, %v1436
    %v1447 = vpack.c.b16 %v1439, %v1438
    %1456 = vmatpush.bf16.msra.mxu0 %v1447
    %1457 = vmatpush.bf16.msra.mxu0 %v1446
    %1458 = vmatpush.bf16.msra.mxu0 %v1445
    %1459 = vmatpush.bf16.msra.mxu0 %v1444
    %1460 = vmatpush.bf16.msra.mxu0 %v1443
    %1461 = vmatpush.bf16.msra.mxu0 %v1442
    %1462 = vmatpush.bf16.msra.mxu0 %v1441
    %1463 = vmatpush.bf16.msra.mxu0 %v1440
    %1464 = vmatmul.bf16.gmra.mxu0 %v1391
    %v1465 = vpop.f32.mrf.mxu0
    %v1466 = vadd.f32 0.0, %v1465
    %v1467 = vpop.f32.mrf.mxu0
    %v1468 = vadd.f32 0.0, %v1467
    %1469 = vdwg.mxu0
    %v1470 = vmax.f32 %v1466, 0.0
    %v1471 = vmax.f32 %v1468, 0.0
    %v1472 = vpack.c.bf16 %v1471, %v1470
    %v1473 = vld [vmem:[%s5] sm:$0xf]
    %v1474 = vld [vmem:[%s5 + $0x4] sm:$0xf]
    %v1475 = vld [vmem:[%s5 + $0x8] sm:$0xf]
    %v1476 = vld [vmem:[%s5 + $0xc] sm:$0xf]
    %v1477 = vld [vmem:[%s5 + $0x10] sm:$0xf]
    %v1478 = vld [vmem:[%s5 + $0x14] sm:$0xf]
    %v1479 = vld [vmem:[%s5 + $0x18] sm:$0xf]
    %v1480 = vld [vmem:[%s5 + $0x1c] sm:$0xf]
    %v1481 = vld [vmem:[%s5 + $0x20] sm:$0xf]
    %v1482 = vld [vmem:[%s5 + $0x24] sm:$0xf]
    %v1483 = vld [vmem:[%s5 + $0x28] sm:$0xf]
    %v1484 = vld [vmem:[%s5 + $0x2c] sm:$0xf]
    %v1485 = vld [vmem:[%s5 + $0x30] sm:$0xf]
    %v1486 = vld [vmem:[%s5 + $0x34] sm:$0xf]
    %v1487 = vld [vmem:[%s5 + $0x38] sm:$0xf]
    %v1488 = vld [vmem:[%s5 + $0x3c] sm:$0xf]
    %v1505 = vunpack.c.l.b16 %v1473
    %v1506 = vunpack.c.l.b16 %v1474
    %v1507 = vunpack.c.l.b16 %v1475
    %v1508 = vunpack.c.l.b16 %v1476
    %v1509 = vunpack.c.l.b16 %v1477
    %v1510 = vunpack.c.l.b16 %v1478
    %v1511 = vunpack.c.l.b16 %v1479
    %v1512 = vunpack.c.l.b16 %v1480
    %v1513 = vunpack.c.l.b16 %v1481
    %v1514 = vunpack.c.l.b16 %v1482
    %v1515 = vunpack.c.l.b16 %v1483
    %v1516 = vunpack.c.l.b16 %v1484
    %v1517 = vunpack.c.l.b16 %v1485
    %v1518 = vunpack.c.l.b16 %v1486
    %v1519 = vunpack.c.l.b16 %v1487
    %v1520 = vunpack.c.l.b16 %v1488
    %v1521 = vpack.c.b16 %v1506, %v1505
    %v1522 = vpack.c.b16 %v1508, %v1507
    %v1523 = vpack.c.b16 %v1510, %v1509
    %v1524 = vpack.c.b16 %v1512, %v1511
    %v1525 = vpack.c.b16 %v1514, %v1513
    %v1526 = vpack.c.b16 %v1516, %v1515
    %v1527 = vpack.c.b16 %v1518, %v1517
    %v1528 = vpack.c.b16 %v1520, %v1519
    %1537 = vmatpush.bf16.msra.mxu0 %v1528
    %1538 = vmatpush.bf16.msra.mxu0 %v1527
    %1539 = vmatpush.bf16.msra.mxu0 %v1526
    %1540 = vmatpush.bf16.msra.mxu0 %v1525
    %1541 = vmatpush.bf16.msra.mxu0 %v1524
    %1542 = vmatpush.bf16.msra.mxu0 %v1523
    %1543 = vmatpush.bf16.msra.mxu0 %v1522
    %1544 = vmatpush.bf16.msra.mxu0 %v1521
    %1545 = vmatmul.bf16.gmra.mxu0 %v1472
    %v1546 = vpop.f32.mrf.mxu0
    %v1547 = vadd.f32 0.0, %v1546
    %v1548 = vpop.f32.mrf.mxu0
    %v1549 = vadd.f32 0.0, %v1548
    %1550 = vdwg.mxu0
    %vm1551 = vcmask 23552
    %1552 = vst.msk [vmem:[%s6] sm:$0xff] %vm1551, %v1547
    %1553 = vst.msk [vmem:[%s6 + $0x8] sm:$0xff] %vm1551, %v1549
    // Predicated region
    $region38: #{_lambda_.1} parent=1 // pred_check
      _
    $region39: #{_lambda_.1} parent=1 // pred_check_branch
      %1555 = sbr.rel (0) target = $region41
    $region40: #{_lambda_.1} parent=1 // pred_region
      _
    $region41: #{_lambda_.1} parent=1 // pred_fallthru
      _
    // Predicated region
    $region42: #{_lambda_.1} parent=1 // pred_check
      _
    $region43: #{_lambda_.1} parent=1 // pred_check_branch
      %1557 = sbr.rel (0) target = $region45
    $region44: #{_lambda_.1} parent=1 // pred_region
      _
    $region45: #{_lambda_.1} parent=1 // pred_fallthru
      _
    %1558 = vsyncpa [#allocation3], 1
    %1559 = vsyncpa [#allocation5], 1

</llo_original>
